<compile_context>
chip_gen: v7x
topology: tpu7x:2x2x1
jax: 0.10.0
libtpu: 0.0.40
codegen_flags: <defaults>
</compile_context>

<pallas_src>
import functools

import jax
import jax.numpy as jnp
from jax import lax
from jax.experimental import pallas as pl
from jax.experimental.pallas import tpu as pltpu

NSPLIT = 2  # leading "parallel" grid axis: v7x's two TensorCores split the reduction


# ---------------------------------------------------------------------------
# 1) VisionEncoder head:  dropout(relu(x @ W + b))
# ---------------------------------------------------------------------------
def _head_kernel(x_ref, w_ref, b_ref, *rest, dropout_p, use_dropout):
    if use_dropout:
        u_ref, o_ref, acc_ref = rest
    else:
        o_ref, acc_ref = rest

    k = pl.program_id(2)

    @pl.when(k == 0)
    def _():
        acc_ref[...] = jnp.zeros_like(acc_ref)

    acc_ref[...] += jnp.dot(
        x_ref[...].astype(jnp.float32),
        w_ref[...].astype(jnp.float32),
        preferred_element_type=jnp.float32,
    )

    @pl.when(k == pl.num_programs(2) - 1)
    def _():
        y = acc_ref[...] + b_ref[...].astype(jnp.float32)   # bias (1, tn) broadcast
        y = jnp.maximum(y, 0.0)                              # ReLU
        if use_dropout:                                       # inverted dropout
            keep = u_ref[...] >= dropout_p
            y = jnp.where(keep, y * (1.0 / (1.0 - dropout_p)), 0.0)
        o_ref[...] = y.astype(o_ref.dtype)


def _pick_tile(dim, tile):
    # `tile` is a multiple of the (8, 128) quanta; fall back to the (always legal)
    # full dimension when it does not divide evenly.
    return tile if dim % tile == 0 else dim


def vision_encoder_head(x, w, b, *, dropout_p=0.4, train=False, dropout_key=None):
    """Pallas equivalent of `self.dropout(F.relu(self.vis_enc_fc1(x)))`."""
    M, K = x.shape
    K2, N = w.shape
    assert K == K2 and b.shape == (N,)
    use_dropout = bool(train) and float(dropout_p) > 0.0

    tm = _pick_tile(M, 128)
    tn = _pick_tile(N, 256)
    tk = _pick_tile(K, 512)

    in_specs = [
        pl.BlockSpec((tm, tk), lambda i, j, k: (i, k)),
        pl.BlockSpec((tk, tn), lambda i, j, k: (k, j)),
        pl.BlockSpec((1, tn), lambda i, j, k: (0, j)),
    ]
    args = [x, w, b.reshape(1, N)]
    if use_dropout:
        # Dropout mask randomness comes from a JAX key; threshold + scale are fused
        # into the kernel epilogue.
        u = jax.random.uniform(dropout_key, (M, N), dtype=jnp.float32)
        in_specs.append(pl.BlockSpec((tm, tn), lambda i, j, k: (i, j)))
        args.append(u)

    kernel = functools.partial(
        _head_kernel, dropout_p=float(dropout_p), use_dropout=use_dropout)

    return pl.pallas_call(
        kernel,
        out_shape=jax.ShapeDtypeStruct((M, N), x.dtype),
        grid_spec=pltpu.PrefetchScalarGridSpec(
            num_scalar_prefetch=0,
            grid=(M // tm, N // tn, K // tk),
            in_specs=in_specs,
            out_specs=pl.BlockSpec((tm, tn), lambda i, j, k: (i, j)),
            scratch_shapes=[pltpu.VMEM((tm, tn), jnp.float32)],
        ),
        compiler_params=pltpu.CompilerParams(
            dimension_semantics=("parallel", "parallel", "arbitrary"),
        ),
    )(*args)


# ---------------------------------------------------------------------------
# 2) MSE reduction:  sum((real - pred) ** 2) / numel   (SRFN reconstruction loss)
# ---------------------------------------------------------------------------
def _mse_partial_kernel(pred_ref, real_ref, out_ref, acc_ref, *,
                        block_rows, valid_rows, blocks_per_split, needs_mask):
    s = pl.program_id(0)   # which half of the rows ("parallel")
    i = pl.program_id(1)   # reduction step within the half ("arbitrary")

    @pl.when(i == 0)
    def _():
        acc_ref[...] = jnp.zeros_like(acc_ref)

    d = real_ref[...].astype(jnp.float32) - pred_ref[...].astype(jnp.float32)
    sq = d * d
    if needs_mask:
        # Zero out (a) garbage rows of a ragged final block and (b) blocks whose
        # (unclamped) global index ran past the array when the block count is odd.
        g = s * blocks_per_split + i
        row_ids = lax.broadcasted_iota(jnp.int32, sq.shape, 0) + g * block_rows
        sq = jnp.where(row_ids < valid_rows, sq, 0.0)

    acc_ref[...] += sq     # full-block vector accumulator: no per-step XLU reduce

    @pl.when(i == pl.num_programs(1) - 1)
    def _():
        out_ref[...] = jnp.broadcast_to(jnp.sum(acc_ref[...]), out_ref.shape)


def mse_pallas(pred, real, *, block_rows_cap=None):
    assert pred.shape == real.shape, "pred/real must have identical shapes"
    n = pred.size

    pred_flat = jnp.ravel(pred)
    real_flat = jnp.ravel(real)

    # Widest lane-dense width that divides numel -> no padding copy in the common
    # case; otherwise pad only up to the next multiple of 128 lanes.
    lane_dim = next((c for c in (1024, 512, 256, 128) if n % c == 0), None)
    if lane_dim is None:
        lane_dim = 128
        pad = (-n) % lane_dim
        pred_flat = jnp.pad(pred_flat, (0, pad))
        real_flat = jnp.pad(real_flat, (0, pad))

    rows = pred_flat.size // lane_dim
    pred2d = pred_flat.reshape(rows, lane_dim)
    real2d = real_flat.reshape(rows, lane_dim)

    # ~1 MiB f32 per input block: amortizes per-grid-step overhead while staying well
    # inside v7x VMEM (2 inputs x 2 pipeline buffers + same-size accumulator ~5 MiB).
    if block_rows_cap is None:
        block_rows_cap = max(8, (1 << 20) // (4 * lane_dim))
    block_rows = rows if rows <= block_rows_cap else block_rows_cap
    assert block_rows == rows or block_rows % 8 == 0
    nblocks = pl.cdiv(rows, block_rows)
    nsplit = NSPLIT if nblocks >= NSPLIT else 1
    bps = pl.cdiv(nblocks, nsplit)                  # reduction blocks per split
    needs_mask = (rows % block_rows != 0) or (bps * nsplit != nblocks)

    kernel = functools.partial(
        _mse_partial_kernel, block_rows=block_rows, valid_rows=rows,
        blocks_per_split=bps, needs_mask=needs_mask)

    def in_map(s, i):
        # Clamp so an overhanging (s, i) never maps out of bounds; the kernel masks
        # that block's contribution to zero.
        return (jnp.minimum(s * bps + i, nblocks - 1), 0)

    partials = pl.pallas_call(
        kernel,
        out_shape=jax.ShapeDtypeStruct((nsplit, 8, 128), jnp.float32),
        grid_spec=pltpu.PrefetchScalarGridSpec(
            num_scalar_prefetch=0,
            grid=(nsplit, bps),
            in_specs=[
                pl.BlockSpec((block_rows, lane_dim), in_map),
                pl.BlockSpec((block_rows, lane_dim), in_map),
            ],
            out_specs=pl.BlockSpec((1, 8, 128), lambda s, i: (s, 0, 0)),
            scratch_shapes=[pltpu.VMEM((block_rows, lane_dim), jnp.float32)],
        ),
        compiler_params=pltpu.CompilerParams(
            dimension_semantics=("parallel", "arbitrary"),
        ),
    )(pred2d, real2d)

    # Tiny host-side finalize: sum <=2 partials and scale by 1/numel (keeps the kernel
    # free of captured jax.Array constants -- the previous compile failure).
    return jnp.sum(partials[:, 0, 0]) / n


if __name__ == "__main__":
    key = jax.random.PRNGKey(0)
    k_feat, k_w, k_b, k_drop, k_pred, k_real = jax.random.split(key, 6)

    # ---- VisionEncoder head: batch=2, vgg19 classifier features=1000, fc1_out=32 ----
    batch, num_ftrs, img_fc1_out = 2, 1000, 32
    feats = jax.random.normal(k_feat, (batch, num_ftrs), dtype=jnp.float32)
    w = jax.random.normal(k_w, (num_ftrs, img_fc1_out), dtype=jnp.float32) * 0.02
    b = jax.random.normal(k_b, (img_fc1_out,), dtype=jnp.float32) * 0.02

    y_eval = jax.block_until_ready(
        vision_encoder_head(feats, w, b, dropout_p=0.4, train=False))
    ref_relu = jnp.maximum(
        jnp.dot(feats, w, precision=lax.Precision.HIGHEST) + b, 0.0)
    assert jnp.allclose(y_eval, ref_relu, rtol=5e-3, atol=5e-3), "head (eval) mismatch"

    y_train = jax.block_until_ready(
        vision_encoder_head(feats, w, b, dropout_p=0.4, train=True, dropout_key=k_drop))
    u = jax.random.uniform(k_drop, (batch, img_fc1_out), dtype=jnp.float32)
    ref_train = jnp.where(u >= 0.4, ref_relu / (1.0 - 0.4), 0.0)
    assert jnp.allclose(y_train, ref_train, rtol=5e-3, atol=5e-3), "head (train) mismatch"

    # ---- MSE reduction: small NCHW tensors ----
    shape = (2, 4, 16, 16)
    pred = jax.random.normal(k_pred, shape, dtype=jnp.float32)
    real = jax.random.normal(k_real, shape, dtype=jnp.float32)
    mse = jax.block_until_ready(mse_pallas(pred, real))
    ref = jnp.sum((real - pred) ** 2) / pred.size
    assert jnp.allclose(mse, ref, rtol=1e-5, atol=1e-5), (mse, ref)

    # Exercise the multi-block / 2-way-split / ragged-tail masking path at small size.
    shape2 = (2, 3, 40, 40)
    pred2 = jax.random.normal(k_pred, shape2, dtype=jnp.float32)
    real2 = jax.random.normal(k_real, shape2, dtype=jnp.float32)
    mse2 = jax.block_until_ready(mse_pallas(pred2, real2, block_rows_cap=16))
    ref2 = jnp.sum((real2 - pred2) ** 2) / pred2.size
    assert jnp.allclose(mse2, ref2, rtol=1e-5, atol=1e-5), (mse2, ref2)

    print("KERNEL_OK")
</pallas_src>

<mosaic_0001>
module attributes {stable_mosaic.version = 11 : i64} {
  func.func @_head_kernel(%arg0: i32, %arg1: i32, %arg2: i32, %arg3: memref<2x1000xf32, #tpu.memory_space<vmem>>, %arg4: memref<1000x32xf32, #tpu.memory_space<vmem>>, %arg5: memref<1x32xf32, #tpu.memory_space<vmem>>, %arg6: memref<2x32xf32, #tpu.memory_space<vmem>>, %arg7: memref<2x32xf32, #tpu.memory_space<vmem>>) attributes {dimension_semantics = [#tpu.dimension_semantics<parallel>, #tpu.dimension_semantics<parallel>, #tpu.dimension_semantics<arbitrary>], iteration_bounds = array<i64: 1, 1, 1>, scalar_prefetch = 0 : i64, scratch_operands = 1 : i64, tpu.core_type = #tpu.core_type<tc>, window_params = [{transform_indices = @transform_0, window_bounds = array<i64: 2, 1000>}, {transform_indices = @transform_1, window_bounds = array<i64: 1000, 32>}, {transform_indices = @transform_2, window_bounds = array<i64: 1, 32>}, {transform_indices = @transform_3, window_bounds = array<i64: 2, 32>}]} {
    %c0_i32 = arith.constant 0 : i32
    %0 = arith.cmpi eq, %arg2, %c0_i32 : i32
    %1 = arith.extui %0 : i1 to i32
    %c0_i32_0 = arith.constant 0 : i32
    %2 = arith.cmpi ne, %1, %c0_i32_0 : i32
    scf.if %2 {
      %cst_10 = arith.constant 0.000000e+00 : f32
      %12 = vector.broadcast %cst_10 : f32 to vector<2x32xf32>
      %c0_11 = arith.constant 0 : index
      %c0_12 = arith.constant 0 : index
      %13 = vector.load %arg7[%c0_11, %c0_12] : memref<2x32xf32, #tpu.memory_space<vmem>>, vector<2x32xf32>
      tpu.vector_store %arg7[%c0_11, %c0_12], %12 {strides = array<i32>} : memref<2x32xf32, #tpu.memory_space<vmem>>, vector<2x32xf32>,
    } else {
    }
    %c0 = arith.constant 0 : index
    %c0_1 = arith.constant 0 : index
    %3 = vector.load %arg7[%c0, %c0_1] : memref<2x32xf32, #tpu.memory_space<vmem>>, vector<2x32xf32>
    %c0_2 = arith.constant 0 : index
    %c0_3 = arith.constant 0 : index
    %4 = vector.load %arg3[%c0_2, %c0_3] : memref<2x1000xf32, #tpu.memory_space<vmem>>, vector<2x1000xf32>
    %c0_4 = arith.constant 0 : index
    %c0_5 = arith.constant 0 : index
    %5 = vector.load %arg4[%c0_4, %c0_5] : memref<1000x32xf32, #tpu.memory_space<vmem>>, vector<1000x32xf32>
    %cst = arith.constant dense<0.000000e+00> : vector<2x32xf32>
    %6 = tpu.matmul %4, %5, %cst {dimension_numbers = #tpu.dot_dimension_numbers<[1], [0], [0], [1], [0, 0, 1, 1], [], []>} : vector<2x1000xf32>, vector<1000x32xf32>, vector<2x32xf32> -> vector<2x32xf32>
    %7 = arith.addf %3, %6 : vector<2x32xf32>
    %c0_6 = arith.constant 0 : index
    %c0_7 = arith.constant 0 : index
    %8 = vector.load %arg7[%c0_6, %c0_7] : memref<2x32xf32, #tpu.memory_space<vmem>>, vector<2x32xf32>
    tpu.vector_store %arg7[%c0_6, %c0_7], %7 {strides = array<i32>} : memref<2x32xf32, #tpu.memory_space<vmem>>, vector<2x32xf32>,
    %c0_i32_8 = arith.constant 0 : i32
    %9 = arith.cmpi eq, %arg2, %c0_i32_8 : i32
    %10 = arith.extui %9 : i1 to i32
    %c0_i32_9 = arith.constant 0 : i32
    %11 = arith.cmpi ne, %10, %c0_i32_9 : i32
    scf.if %11 {
      %c0_10 = arith.constant 0 : index
      %c0_11 = arith.constant 0 : index
      %12 = vector.load %arg7[%c0_10, %c0_11] : memref<2x32xf32, #tpu.memory_space<vmem>>, vector<2x32xf32>
      %c0_12 = arith.constant 0 : index
      %c0_13 = arith.constant 0 : index
      %13 = vector.load %arg5[%c0_12, %c0_13] : memref<1x32xf32, #tpu.memory_space<vmem>>, vector<1x32xf32>
      %14 = vector.broadcast %13 : vector<1x32xf32> to vector<2x32xf32>
      %15 = arith.addf %12, %14 : vector<2x32xf32>
      %cst_14 = arith.constant 0.000000e+00 : f32
      %16 = vector.broadcast %cst_14 : f32 to vector<2x32xf32>
      %17 = arith.maximumf %15, %16 : vector<2x32xf32>
      %c0_15 = arith.constant 0 : index
      %c0_16 = arith.constant 0 : index
      %18 = vector.load %arg6[%c0_15, %c0_16] : memref<2x32xf32, #tpu.memory_space<vmem>>, vector<2x32xf32>
      tpu.vector_store %arg6[%c0_15, %c0_16], %17 {strides = array<i32>} : memref<2x32xf32, #tpu.memory_space<vmem>>, vector<2x32xf32>,
    } else {
    }
    return
  }
  func.func @transform_0(%arg0: i32, %arg1: i32, %arg2: i32) -> (i32, i32) {
    %c0_i32 = arith.constant 0 : i32
    return %arg0, %arg2 : i32, i32
  }
  func.func @transform_1(%arg0: i32, %arg1: i32, %arg2: i32) -> (i32, i32) {
    %c0_i32 = arith.constant 0 : i32
    return %arg2, %arg1 : i32, i32
  }
  func.func @transform_2(%arg0: i32, %arg1: i32, %arg2: i32) -> (i32, i32) {
    %c0_i32 = arith.constant 0 : i32
    %c0_i32_0 = arith.constant 0 : i32
    return %c0_i32, %arg1 : i32, i32
  }
  func.func @transform_3(%arg0: i32, %arg1: i32, %arg2: i32) -> (i32, i32) {
    %c0_i32 = arith.constant 0 : i32
    return %arg0, %arg1 : i32, i32
  }
}

</mosaic_0001>

<llo_original>
// kernel: tpu_custom_call.1
$region0: #{tpu_custom_call.1}
  #allocation0 [shape = 'u32[]', space=smem, size = 0x4, offset = 0x4, fixed_abs, tag = 'smem constant byte address 0x4 - core index']
  #allocation1 [shape = 'u32[144,128]{1,0:T(1,128)}', space=vmem, size = 0x12000, scoped, tag = 'internal scratch']
  #allocation2 [shape = 'f32[2,32]{1,0:T(2,128)}', space=vmem, size = 0x400, scoped, tag = 'scratch operand']
  %s0 = inlined_call_operand.vmem [shape: f32[2,1000], index: 0, kind: input, shape index: {}]
  %s1 = inlined_call_operand.vmem [shape: f32[1000,32], index: 1, kind: input, shape index: {}]
  %s2 = inlined_call_operand.vmem [shape: f32[1,32], index: 2, kind: input, shape index: {}]
  %s3 = inlined_call_operand.hbm [shape: f32[2,32], index: 3, kind: output, shape index: {}]
  %s4 = sld [smem:[#allocation0]]
  $region30: #{tpu_custom_call.1} parent=0
    _
  %s6 = ssub.s32 1, %s4
  %s7 = scalar_select 0, %s6, %s4
  $region1: #{tpu_custom_call.1} parent=0
    #allocation3 [shape = 'u8[1024]{0}', space=vmem, size = 0x400, scoped, tag = 'output window, operand 0, single buffered']
    #allocation4 [shape = 's32[1]{0}', space=sflag, size = 0x4, scoped, tag = 'scoped memory for tpu_custom_call.1']
    %8 = vsyncpa [#allocation4], 0
    // Predicated region
    $region2: #{tpu_custom_call.1} parent=1 // pred_check
      _
    $region3: #{tpu_custom_call.1} parent=1 // pred_check_branch
      %10 = sbr.rel (0) target = $region5
    $region4: #{tpu_custom_call.1} parent=1 // pred_region
      _
    $region5: #{tpu_custom_call.1} parent=1 // pred_fallthru
      _
    // Predicated region
    $region6: #{tpu_custom_call.1} parent=1 // pred_check
      _
    $region7: #{tpu_custom_call.1} parent=1 // pred_check_branch
      %12 = sbr.rel (0) target = $region9
    $region8: #{tpu_custom_call.1} parent=1 // pred_region
      _
    $region9: #{tpu_custom_call.1} parent=1 // pred_fallthru
      _
    // Predicated region
    $region10: #{tpu_custom_call.1} parent=1 // pred_check
      _
    $region11: #{tpu_custom_call.1} parent=1 // pred_check_branch
      %14 = sbr.rel (0) target = $region13
    $region12: #{tpu_custom_call.1} parent=1 // pred_region
      _
    $region13: #{tpu_custom_call.1} parent=1 // pred_fallthru
      _
    %p15 = scmp.eq.s32.totalorder 0, 0
    // Predicated region
    $region14: #{tpu_custom_call.1} parent=1 // pred_check
      %p16 = pneg %p15
    $region15: #{tpu_custom_call.1} parent=1 // pred_check_branch
      %18 = sbr.rel (%p16) target = $region17
    $region16: #{tpu_custom_call.1} parent=1 // pred_region
      %vm19 = vcmask 254976
      %20 = vst.msk [vmem:[#allocation2] sm:$0x3] %vm19, 0.0
    $region17: #{tpu_custom_call.1} parent=1 // pred_fallthru
      _
    %v21 = vld [vmem:[#allocation2] sm:$0x3]
    %v22 = vld [vmem:[%s0] sm:$0xff]
    %v23 = vld [vmem:[%s0 + $0x8] sm:$0xff]
    %v24 = vld [vmem:[%s1] sm:$0xff]
    %v25 = vld [vmem:[%s1 + $0x8] sm:$0xff]
    %v26 = vld [vmem:[%s1 + $0x10] sm:$0xff]
    %v27 = vld [vmem:[%s1 + $0x18] sm:$0xff]
    %v28 = vld [vmem:[%s1 + $0x20] sm:$0xff]
    %v29 = vld [vmem:[%s1 + $0x28] sm:$0xff]
    %v30 = vld [vmem:[%s1 + $0x30] sm:$0xff]
    %v31 = vld [vmem:[%s1 + $0x38] sm:$0xff]
    %v32 = vld [vmem:[%s1 + $0x40] sm:$0xff]
    %v33 = vld [vmem:[%s1 + $0x48] sm:$0xff]
    %v34 = vld [vmem:[%s1 + $0x50] sm:$0xff]
    %v35 = vld [vmem:[%s1 + $0x58] sm:$0xff]
    %v36 = vld [vmem:[%s1 + $0x60] sm:$0xff]
    %v37 = vld [vmem:[%s1 + $0x68] sm:$0xff]
    %v38 = vld [vmem:[%s1 + $0x70] sm:$0xff]
    %v39 = vld [vmem:[%s1 + $0x78] sm:$0xff]
    %v40 = vld [vmem:[%s1 + $0x80] sm:$0xff]
    %v41 = vld [vmem:[%s1 + $0x88] sm:$0xff]
    %v42 = vld [vmem:[%s1 + $0x90] sm:$0xff]
    %v43 = vld [vmem:[%s1 + $0x98] sm:$0xff]
    %v44 = vld [vmem:[%s1 + $0xa0] sm:$0xff]
    %v45 = vld [vmem:[%s1 + $0xa8] sm:$0xff]
    %v46 = vld [vmem:[%s1 + $0xb0] sm:$0xff]
    %v47 = vld [vmem:[%s1 + $0xb8] sm:$0xff]
    %v48 = vld [vmem:[%s1 + $0xc0] sm:$0xff]
    %v49 = vld [vmem:[%s1 + $0xc8] sm:$0xff]
    %v50 = vld [vmem:[%s1 + $0xd0] sm:$0xff]
    %v51 = vld [vmem:[%s1 + $0xd8] sm:$0xff]
    %v52 = vld [vmem:[%s1 + $0xe0] sm:$0xff]
    %v53 = vld [vmem:[%s1 + $0xe8] sm:$0xff]
    %v54 = vld [vmem:[%s1 + $0xf0] sm:$0xff]
    %v55 = vld [vmem:[%s1 + $0xf8] sm:$0xff]
    %v56 = vld [vmem:[%s1 + $0x100] sm:$0xff]
    %v57 = vld [vmem:[%s1 + $0x108] sm:$0xff]
    %v58 = vld [vmem:[%s1 + $0x110] sm:$0xff]
    %v59 = vld [vmem:[%s1 + $0x118] sm:$0xff]
    %v60 = vld [vmem:[%s1 + $0x120] sm:$0xff]
    %v61 = vld [vmem:[%s1 + $0x128] sm:$0xff]
    %v62 = vld [vmem:[%s1 + $0x130] sm:$0xff]
    %v63 = vld [vmem:[%s1 + $0x138] sm:$0xff]
    %v64 = vld [vmem:[%s1 + $0x140] sm:$0xff]
    %v65 = vld [vmem:[%s1 + $0x148] sm:$0xff]
    %v66 = vld [vmem:[%s1 + $0x150] sm:$0xff]
    %v67 = vld [vmem:[%s1 + $0x158] sm:$0xff]
    %v68 = vld [vmem:[%s1 + $0x160] sm:$0xff]
    %v69 = vld [vmem:[%s1 + $0x168] sm:$0xff]
    %v70 = vld [vmem:[%s1 + $0x170] sm:$0xff]
    %v71 = vld [vmem:[%s1 + $0x178] sm:$0xff]
    %v72 = vld [vmem:[%s1 + $0x180] sm:$0xff]
    %v73 = vld [vmem:[%s1 + $0x188] sm:$0xff]
    %v74 = vld [vmem:[%s1 + $0x190] sm:$0xff]
    %v75 = vld [vmem:[%s1 + $0x198] sm:$0xff]
    %v76 = vld [vmem:[%s1 + $0x1a0] sm:$0xff]
    %v77 = vld [vmem:[%s1 + $0x1a8] sm:$0xff]
    %v78 = vld [vmem:[%s1 + $0x1b0] sm:$0xff]
    %v79 = vld [vmem:[%s1 + $0x1b8] sm:$0xff]
    %v80 = vld [vmem:[%s1 + $0x1c0] sm:$0xff]
    %v81 = vld [vmem:[%s1 + $0x1c8] sm:$0xff]
    %v82 = vld [vmem:[%s1 + $0x1d0] sm:$0xff]
    %v83 = vld [vmem:[%s1 + $0x1d8] sm:$0xff]
    %v84 = vld [vmem:[%s1 + $0x1e0] sm:$0xff]
    %v85 = vld [vmem:[%s1 + $0x1e8] sm:$0xff]
    %v86 = vld [vmem:[%s1 + $0x1f0] sm:$0xff]
    %v87 = vld [vmem:[%s1 + $0x1f8] sm:$0xff]
    %v88 = vld [vmem:[%s1 + $0x200] sm:$0xff]
    %v89 = vld [vmem:[%s1 + $0x208] sm:$0xff]
    %v90 = vld [vmem:[%s1 + $0x210] sm:$0xff]
    %v91 = vld [vmem:[%s1 + $0x218] sm:$0xff]
    %v92 = vld [vmem:[%s1 + $0x220] sm:$0xff]
    %v93 = vld [vmem:[%s1 + $0x228] sm:$0xff]
    %v94 = vld [vmem:[%s1 + $0x230] sm:$0xff]
    %v95 = vld [vmem:[%s1 + $0x238] sm:$0xff]
    %v96 = vld [vmem:[%s1 + $0x240] sm:$0xff]
    %v97 = vld [vmem:[%s1 + $0x248] sm:$0xff]
    %v98 = vld [vmem:[%s1 + $0x250] sm:$0xff]
    %v99 = vld [vmem:[%s1 + $0x258] sm:$0xff]
    %v100 = vld [vmem:[%s1 + $0x260] sm:$0xff]
    %v101 = vld [vmem:[%s1 + $0x268] sm:$0xff]
    %v102 = vld [vmem:[%s1 + $0x270] sm:$0xff]
    %v103 = vld [vmem:[%s1 + $0x278] sm:$0xff]
    %v104 = vld [vmem:[%s1 + $0x280] sm:$0xff]
    %v105 = vld [vmem:[%s1 + $0x288] sm:$0xff]
    %v106 = vld [vmem:[%s1 + $0x290] sm:$0xff]
    %v107 = vld [vmem:[%s1 + $0x298] sm:$0xff]
    %v108 = vld [vmem:[%s1 + $0x2a0] sm:$0xff]
    %v109 = vld [vmem:[%s1 + $0x2a8] sm:$0xff]
    %v110 = vld [vmem:[%s1 + $0x2b0] sm:$0xff]
    %v111 = vld [vmem:[%s1 + $0x2b8] sm:$0xff]
    %v112 = vld [vmem:[%s1 + $0x2c0] sm:$0xff]
    %v113 = vld [vmem:[%s1 + $0x2c8] sm:$0xff]
    %v114 = vld [vmem:[%s1 + $0x2d0] sm:$0xff]
    %v115 = vld [vmem:[%s1 + $0x2d8] sm:$0xff]
    %v116 = vld [vmem:[%s1 + $0x2e0] sm:$0xff]
    %v117 = vld [vmem:[%s1 + $0x2e8] sm:$0xff]
    %v118 = vld [vmem:[%s1 + $0x2f0] sm:$0xff]
    %v119 = vld [vmem:[%s1 + $0x2f8] sm:$0xff]
    %v120 = vld [vmem:[%s1 + $0x300] sm:$0xff]
    %v121 = vld [vmem:[%s1 + $0x308] sm:$0xff]
    %v122 = vld [vmem:[%s1 + $0x310] sm:$0xff]
    %v123 = vld [vmem:[%s1 + $0x318] sm:$0xff]
    %v124 = vld [vmem:[%s1 + $0x320] sm:$0xff]
    %v125 = vld [vmem:[%s1 + $0x328] sm:$0xff]
    %v126 = vld [vmem:[%s1 + $0x330] sm:$0xff]
    %v127 = vld [vmem:[%s1 + $0x338] sm:$0xff]
    %v128 = vld [vmem:[%s1 + $0x340] sm:$0xff]
    %v129 = vld [vmem:[%s1 + $0x348] sm:$0xff]
    %v130 = vld [vmem:[%s1 + $0x350] sm:$0xff]
    %v131 = vld [vmem:[%s1 + $0x358] sm:$0xff]
    %v132 = vld [vmem:[%s1 + $0x360] sm:$0xff]
    %v133 = vld [vmem:[%s1 + $0x368] sm:$0xff]
    %v134 = vld [vmem:[%s1 + $0x370] sm:$0xff]
    %v135 = vld [vmem:[%s1 + $0x378] sm:$0xff]
    %v136 = vld [vmem:[%s1 + $0x380] sm:$0xff]
    %v137 = vld [vmem:[%s1 + $0x388] sm:$0xff]
    %v138 = vld [vmem:[%s1 + $0x390] sm:$0xff]
    %v139 = vld [vmem:[%s1 + $0x398] sm:$0xff]
    %v140 = vld [vmem:[%s1 + $0x3a0] sm:$0xff]
    %v141 = vld [vmem:[%s1 + $0x3a8] sm:$0xff]
    %v142 = vld [vmem:[%s1 + $0x3b0] sm:$0xff]
    %v143 = vld [vmem:[%s1 + $0x3b8] sm:$0xff]
    %v144 = vld [vmem:[%s1 + $0x3c0] sm:$0xff]
    %v145 = vld [vmem:[%s1 + $0x3c8] sm:$0xff]
    %v146 = vld [vmem:[%s1 + $0x3d0] sm:$0xff]
    %v147 = vld [vmem:[%s1 + $0x3d8] sm:$0xff]
    %v148 = vld [vmem:[%s1 + $0x3e0] sm:$0xff]
    %v151 = vcombine.high %v22, %v22
    %v153 = vunpack.c.l.s4 1983009808
    %v154 = vunpack.c.0.s8 %v153
    %v155 = vlaneseq
    %v156 = vshrl.u32 %v155, 7
    %v157 = vsub.s32 %v154, %v156
    %v158 = vrot.slane %v22, %v157
    %v160 = vunpack.c.l.s4 1983009808
    %v161 = vunpack.c.0.s8 %v160
    %v162 = vlaneseq
    %v163 = vshrl.u32 %v162, 7
    %v164 = vsub.s32 %v161, %v163
    %v165 = vrot.slane %v151, %v164
    %v166 = vcombine.high %v158, %v158
    %v167 = vcombine.high %v165, %v165
    %v168 = vcombine.high %v23, %v23
    %v170 = vunpack.c.l.s4 1983009808
    %v171 = vunpack.c.0.s8 %v170
    %v172 = vlaneseq
    %v173 = vshrl.u32 %v172, 7
    %v174 = vsub.s32 %v171, %v173
    %v175 = vrot.slane %v23, %v174
    %v177 = vunpack.c.l.s4 1983009808
    %v178 = vunpack.c.0.s8 %v177
    %v179 = vlaneseq
    %v180 = vshrl.u32 %v179, 7
    %v181 = vsub.s32 %v178, %v180
    %v182 = vrot.slane %v168, %v181
    %v183 = vcombine.high %v175, %v175
    %v184 = vcombine.high %v182, %v182
    %vm192 = vcmask 850944
    %v193 = vsel %vm192, %v184, 0
    %195 = vmatprep.subr.mxu0 0.0
    %196 = vmatpush1.msra.mxu0 %v24
    %197 = vmatprep.subr.mxu0 0.0
    %198 = vmatpush1.msra.mxu0 %v25
    %199 = vmatprep.subr.mxu0 0.0
    %200 = vmatpush1.msra.mxu0 %v26
    %201 = vmatprep.subr.mxu0 0.0
    %202 = vmatpush1.msra.mxu0 %v27
    %203 = vmatprep.subr.mxu0 0.0
    %204 = vmatpush1.msra.mxu0 %v28
    %205 = vmatprep.subr.mxu0 0.0
    %206 = vmatpush1.msra.mxu0 %v29
    %207 = vmatprep.subr.mxu0 0.0
    %208 = vmatpush1.msra.mxu0 %v30
    %209 = vmatprep.subr.mxu0 0.0
    %210 = vmatpush1.msra.mxu0 %v31
    %211 = vmatprep.subr.mxu0 0.0
    %212 = vmatpush1.msra.mxu0 %v32
    %213 = vmatprep.subr.mxu0 0.0
    %214 = vmatpush1.msra.mxu0 %v33
    %215 = vmatprep.subr.mxu0 0.0
    %216 = vmatpush1.msra.mxu0 %v34
    %217 = vmatprep.subr.mxu0 0.0
    %218 = vmatpush1.msra.mxu0 %v35
    %219 = vmatprep.subr.mxu0 0.0
    %220 = vmatpush1.msra.mxu0 %v36
    %221 = vmatprep.subr.mxu0 0.0
    %222 = vmatpush1.msra.mxu0 %v37
    %223 = vmatprep.subr.mxu0 0.0
    %224 = vmatpush1.msra.mxu0 %v38
    %225 = vmatprep.subr.mxu0 0.0
    %226 = vmatpush1.msra.mxu0 %v39
    %227 = vmatprep.subr.mxu0 0.0
    %228 = vmatpush1.msra.mxu0 %v40
    %229 = vmatprep.subr.mxu0 0.0
    %230 = vmatpush1.msra.mxu0 %v41
    %231 = vmatprep.subr.mxu0 0.0
    %232 = vmatpush1.msra.mxu0 %v42
    %233 = vmatprep.subr.mxu0 0.0
    %234 = vmatpush1.msra.mxu0 %v43
    %235 = vmatprep.subr.mxu0 0.0
    %236 = vmatpush1.msra.mxu0 %v44
    %237 = vmatprep.subr.mxu0 0.0
    %238 = vmatpush1.msra.mxu0 %v45
    %239 = vmatprep.subr.mxu0 0.0
    %240 = vmatpush1.msra.mxu0 %v46
    %241 = vmatprep.subr.mxu0 0.0
    %242 = vmatpush1.msra.mxu0 %v47
    %243 = vmatprep.subr.mxu0 0.0
    %244 = vmatpush1.msra.mxu0 %v48
    %245 = vmatprep.subr.mxu0 0.0
    %246 = vmatpush1.msra.mxu0 %v49
    %247 = vmatprep.subr.mxu0 0.0
    %248 = vmatpush1.msra.mxu0 %v50
    %249 = vmatprep.subr.mxu0 0.0
    %250 = vmatpush1.msra.mxu0 %v51
    %251 = vmatprep.subr.mxu0 0.0
    %252 = vmatpush1.msra.mxu0 %v52
    %253 = vmatprep.subr.mxu0 0.0
    %254 = vmatpush1.msra.mxu0 %v53
    %255 = vmatprep.subr.mxu0 0.0
    %256 = vmatpush1.msra.mxu0 %v54
    %257 = vmatprep.subr.mxu0 0.0
    %258 = vmatpush1.msra.mxu0 %v55
    %259 = vmatprep.mubr.f32.mxu0 %v166
    %260 = vmatmul.mubr.f32.gmra.mrb[0].mxu0 %v158
    %v261 = vpop.f32.mrb[0].mxu0
    %v262 = vadd.f32 0.0, %v261
    %v263 = vpop.f32.mrb[0].mxu0
    %264 = vdwg.mxu0
    %265 = vmatprep.subr.mxu0 0.0
    %266 = vmatpush1.msra.mxu0 %v56
    %267 = vmatprep.subr.mxu0 0.0
    %268 = vmatpush1.msra.mxu0 %v57
    %269 = vmatprep.subr.mxu0 0.0
    %270 = vmatpush1.msra.mxu0 %v58
    %271 = vmatprep.subr.mxu0 0.0
    %272 = vmatpush1.msra.mxu0 %v59
    %273 = vmatprep.subr.mxu0 0.0
    %274 = vmatpush1.msra.mxu0 %v60
    %275 = vmatprep.subr.mxu0 0.0
    %276 = vmatpush1.msra.mxu0 %v61
    %277 = vmatprep.subr.mxu0 0.0
    %278 = vmatpush1.msra.mxu0 %v62
    %279 = vmatprep.subr.mxu0 0.0
    %280 = vmatpush1.msra.mxu0 %v63
    %281 = vmatprep.subr.mxu0 0.0
    %282 = vmatpush1.msra.mxu0 %v64
    %283 = vmatprep.subr.mxu0 0.0
    %284 = vmatpush1.msra.mxu0 %v65
    %285 = vmatprep.subr.mxu0 0.0
    %286 = vmatpush1.msra.mxu0 %v66
    %287 = vmatprep.subr.mxu0 0.0
    %288 = vmatpush1.msra.mxu0 %v67
    %289 = vmatprep.subr.mxu0 0.0
    %290 = vmatpush1.msra.mxu0 %v68
    %291 = vmatprep.subr.mxu0 0.0
    %292 = vmatpush1.msra.mxu0 %v69
    %293 = vmatprep.subr.mxu0 0.0
    %294 = vmatpush1.msra.mxu0 %v70
    %295 = vmatprep.subr.mxu0 0.0
    %296 = vmatpush1.msra.mxu0 %v71
    %297 = vmatprep.subr.mxu0 0.0
    %298 = vmatpush1.msra.mxu0 %v72
    %299 = vmatprep.subr.mxu0 0.0
    %300 = vmatpush1.msra.mxu0 %v73
    %301 = vmatprep.subr.mxu0 0.0
    %302 = vmatpush1.msra.mxu0 %v74
    %303 = vmatprep.subr.mxu0 0.0
    %304 = vmatpush1.msra.mxu0 %v75
    %305 = vmatprep.subr.mxu0 0.0
    %306 = vmatpush1.msra.mxu0 %v76
    %307 = vmatprep.subr.mxu0 0.0
    %308 = vmatpush1.msra.mxu0 %v77
    %309 = vmatprep.subr.mxu0 0.0
    %310 = vmatpush1.msra.mxu0 %v78
    %311 = vmatprep.subr.mxu0 0.0
    %312 = vmatpush1.msra.mxu0 %v79
    %313 = vmatprep.subr.mxu0 0.0
    %314 = vmatpush1.msra.mxu0 %v80
    %315 = vmatprep.subr.mxu0 0.0
    %316 = vmatpush1.msra.mxu0 %v81
    %317 = vmatprep.subr.mxu0 0.0
    %318 = vmatpush1.msra.mxu0 %v82
    %319 = vmatprep.subr.mxu0 0.0
    %320 = vmatpush1.msra.mxu0 %v83
    %321 = vmatprep.subr.mxu0 0.0
    %322 = vmatpush1.msra.mxu0 %v84
    %323 = vmatprep.subr.mxu0 0.0
    %324 = vmatpush1.msra.mxu0 %v85
    %325 = vmatprep.subr.mxu0 0.0
    %326 = vmatpush1.msra.mxu0 %v86
    %327 = vmatprep.subr.mxu0 0.0
    %328 = vmatpush1.msra.mxu0 %v87
    %329 = vmatprep.mubr.f32.mxu0 %v167
    %330 = vmatmul.mubr.f32.gmra.mrb[0].mxu0 %v165
    %v331 = vpop.f32.mrb[0].mxu0
    %v332 = vadd.f32 %v262, %v331
    %v333 = vpop.f32.mrb[0].mxu0
    %334 = vdwg.mxu0
    %335 = vmatprep.subr.mxu0 0.0
    %336 = vmatpush1.msra.mxu0 %v88
    %337 = vmatprep.subr.mxu0 0.0
    %338 = vmatpush1.msra.mxu0 %v89
    %339 = vmatprep.subr.mxu0 0.0
    %340 = vmatpush1.msra.mxu0 %v90
    %341 = vmatprep.subr.mxu0 0.0
    %342 = vmatpush1.msra.mxu0 %v91
    %343 = vmatprep.subr.mxu0 0.0
    %344 = vmatpush1.msra.mxu0 %v92
    %345 = vmatprep.subr.mxu0 0.0
    %346 = vmatpush1.msra.mxu0 %v93
    %347 = vmatprep.subr.mxu0 0.0
    %348 = vmatpush1.msra.mxu0 %v94
    %349 = vmatprep.subr.mxu0 0.0
    %350 = vmatpush1.msra.mxu0 %v95
    %351 = vmatprep.subr.mxu0 0.0
    %352 = vmatpush1.msra.mxu0 %v96
    %353 = vmatprep.subr.mxu0 0.0
    %354 = vmatpush1.msra.mxu0 %v97
    %355 = vmatprep.subr.mxu0 0.0
    %356 = vmatpush1.msra.mxu0 %v98
    %357 = vmatprep.subr.mxu0 0.0
    %358 = vmatpush1.msra.mxu0 %v99
    %359 = vmatprep.subr.mxu0 0.0
    %360 = vmatpush1.msra.mxu0 %v100
    %361 = vmatprep.subr.mxu0 0.0
    %362 = vmatpush1.msra.mxu0 %v101
    %363 = vmatprep.subr.mxu0 0.0
    %364 = vmatpush1.msra.mxu0 %v102
    %365 = vmatprep.subr.mxu0 0.0
    %366 = vmatpush1.msra.mxu0 %v103
    %367 = vmatprep.subr.mxu0 0.0
    %368 = vmatpush1.msra.mxu0 %v104
    %369 = vmatprep.subr.mxu0 0.0
    %370 = vmatpush1.msra.mxu0 %v105
    %371 = vmatprep.subr.mxu0 0.0
    %372 = vmatpush1.msra.mxu0 %v106
    %373 = vmatprep.subr.mxu0 0.0
    %374 = vmatpush1.msra.mxu0 %v107
    %375 = vmatprep.subr.mxu0 0.0
    %376 = vmatpush1.msra.mxu0 %v108
    %377 = vmatprep.subr.mxu0 0.0
    %378 = vmatpush1.msra.mxu0 %v109
    %379 = vmatprep.subr.mxu0 0.0
    %380 = vmatpush1.msra.mxu0 %v110
    %381 = vmatprep.subr.mxu0 0.0
    %382 = vmatpush1.msra.mxu0 %v111
    %383 = vmatprep.subr.mxu0 0.0
    %384 = vmatpush1.msra.mxu0 %v112
    %385 = vmatprep.subr.mxu0 0.0
    %386 = vmatpush1.msra.mxu0 %v113
    %387 = vmatprep.subr.mxu0 0.0
    %388 = vmatpush1.msra.mxu0 %v114
    %389 = vmatprep.subr.mxu0 0.0
    %390 = vmatpush1.msra.mxu0 %v115
    %391 = vmatprep.subr.mxu0 0.0
    %392 = vmatpush1.msra.mxu0 %v116
    %393 = vmatprep.subr.mxu0 0.0
    %394 = vmatpush1.msra.mxu0 %v117
    %395 = vmatprep.subr.mxu0 0.0
    %396 = vmatpush1.msra.mxu0 %v118
    %397 = vmatprep.subr.mxu0 0.0
    %398 = vmatpush1.msra.mxu0 %v119
    %399 = vmatprep.mubr.f32.mxu0 %v183
    %400 = vmatmul.mubr.f32.gmra.mrb[0].mxu0 %v175
    %v401 = vpop.f32.mrb[0].mxu0
    %v402 = vadd.f32 %v332, %v401
    %v403 = vpop.f32.mrb[0].mxu0
    %404 = vdwg.mxu0
    %405 = vmatprep.subr.mxu0 0.0
    %406 = vmatpush1.msra.mxu0 %v120
    %407 = vmatprep.subr.mxu0 0.0
    %408 = vmatpush1.msra.mxu0 %v121
    %409 = vmatprep.subr.mxu0 0.0
    %410 = vmatpush1.msra.mxu0 %v122
    %411 = vmatprep.subr.mxu0 0.0
    %412 = vmatpush1.msra.mxu0 %v123
    %413 = vmatprep.subr.mxu0 0.0
    %414 = vmatpush1.msra.mxu0 %v124
    %415 = vmatprep.subr.mxu0 0.0
    %416 = vmatpush1.msra.mxu0 %v125
    %417 = vmatprep.subr.mxu0 0.0
    %418 = vmatpush1.msra.mxu0 %v126
    %419 = vmatprep.subr.mxu0 0.0
    %420 = vmatpush1.msra.mxu0 %v127
    %421 = vmatprep.subr.mxu0 0.0
    %422 = vmatpush1.msra.mxu0 %v128
    %423 = vmatprep.subr.mxu0 0.0
    %424 = vmatpush1.msra.mxu0 %v129
    %425 = vmatprep.subr.mxu0 0.0
    %426 = vmatpush1.msra.mxu0 %v130
    %427 = vmatprep.subr.mxu0 0.0
    %428 = vmatpush1.msra.mxu0 %v131
    %429 = vmatprep.subr.mxu0 0.0
    %430 = vmatpush1.msra.mxu0 %v132
    %431 = vmatprep.subr.mxu0 0.0
    %432 = vmatpush1.msra.mxu0 %v133
    %433 = vmatprep.subr.mxu0 0.0
    %434 = vmatpush1.msra.mxu0 %v134
    %435 = vmatprep.subr.mxu0 0.0
    %436 = vmatpush1.msra.mxu0 %v135
    %437 = vmatprep.subr.mxu0 0.0
    %438 = vmatpush1.msra.mxu0 %v136
    %439 = vmatprep.subr.mxu0 0.0
    %440 = vmatpush1.msra.mxu0 %v137
    %441 = vmatprep.subr.mxu0 0.0
    %442 = vmatpush1.msra.mxu0 %v138
    %443 = vmatprep.subr.mxu0 0.0
    %444 = vmatpush1.msra.mxu0 %v139
    %445 = vmatprep.subr.mxu0 0.0
    %446 = vmatpush1.msra.mxu0 %v140
    %447 = vmatprep.subr.mxu0 0.0
    %448 = vmatpush1.msra.mxu0 %v141
    %449 = vmatprep.subr.mxu0 0.0
    %450 = vmatpush1.msra.mxu0 %v142
    %451 = vmatprep.subr.mxu0 0.0
    %452 = vmatpush1.msra.mxu0 %v143
    %453 = vmatprep.subr.mxu0 0.0
    %454 = vmatpush1.msra.mxu0 %v144
    %455 = vmatprep.subr.mxu0 0.0
    %456 = vmatpush1.msra.mxu0 %v145
    %457 = vmatprep.subr.mxu0 0.0
    %458 = vmatpush1.msra.mxu0 %v146
    %459 = vmatprep.subr.mxu0 0.0
    %460 = vmatpush1.msra.mxu0 %v147
    %461 = vmatprep.subr.mxu0 0.0
    %462 = vmatpush1.msra.mxu0 %v148
    %463 = vmatprep.subr.mxu0 0.0
    %464 = vmatpush1.msra.mxu0 0.0
    %465 = vmatprep.subr.mxu0 0.0
    %466 = vmatpush1.msra.mxu0 0.0
    %467 = vmatprep.subr.mxu0 0.0
    %468 = vmatpush1.msra.mxu0 0.0
    %469 = vmatprep.mubr.f32.mxu0 %v193
    %470 = vmatmul.mubr.f32.gmra.mrb[0].mxu0 %v182
    %v471 = vpop.f32.mrb[0].mxu0
    %v472 = vadd.f32 %v402, %v471
    %v473 = vpop.f32.mrb[0].mxu0
    %474 = vdwg.mxu0
    %v475 = vadd.f32 %v21, %v472
    %vm476 = vcmask 254976
    %477 = vst.msk [vmem:[#allocation2] sm:$0x3] %vm476, %v475
    // Predicated region
    $region18: #{tpu_custom_call.1} parent=1 // pred_check
      %p478 = pneg %p15
    $region19: #{tpu_custom_call.1} parent=1 // pred_check_branch
      %480 = sbr.rel (%p478) target = $region21
    $region20: #{tpu_custom_call.1} parent=1 // pred_region
      %v481 = vld [vmem:[#allocation2] sm:$0x3]
      %v482 = vld [vmem:[%s2] sm:$0x1]
      %v484 = vlaneseq
      %v485 = vshrl.u32 %v484, 7
      %v486 = vsub.s32 0, %v485
      %v487 = vrot.slane %v482, %v486
      %v489 = vadd.f32 %v481, %v487
      %v490 = vmax.f32 %v489, 0.0
      %491 = vst.msk [vmem:[#allocation3] sm:$0x3] %vm476, %v490
    $region21: #{tpu_custom_call.1} parent=1 // pred_fallthru
      _
    // Predicated region
    $region22: #{tpu_custom_call.1} parent=1 // pred_check
      _
    $region23: #{tpu_custom_call.1} parent=1 // pred_check_branch
      %493 = sbr.rel (0) target = $region25
    $region24: #{tpu_custom_call.1} parent=1 // pred_region
      %s495 = ssub.s32 32, 32
      %496 = vsyncadd [#allocation4], %s495
      %s498 = sshll.u32 [#allocation3], 4
      %s499 = int_to_ptr.vmem [resolvable:$true] %s498
      %501 = dma.vmem_to_hbm [thread:$0]  %s499, 32, %s3, [#allocation4]
    $region25: #{tpu_custom_call.1} parent=1 // pred_fallthru
      _
    // Predicated region
    $region26: #{tpu_custom_call.1} parent=1 // pred_check
      _
    $region27: #{tpu_custom_call.1} parent=1 // pred_check_branch
      %503 = sbr.rel (0) target = $region29
    $region28: #{tpu_custom_call.1} parent=1 // pred_region
      %504 = dma.done [#allocation4], 32
    $region29: #{tpu_custom_call.1} parent=1 // pred_fallthru
      _
    %505 = vsyncpa [#allocation4], 1

</llo_original>
